<compile_context>
chip_gen: v6e
topology: v6e:2x2x1
jax: 0.10.0
libtpu: 0.0.40
codegen_flags: <defaults>
</compile_context>

<pallas_src>
import functools
import math

import jax
import jax.numpy as jnp
import numpy as np
from jax import lax
from jax.experimental import pallas as pl
from jax.experimental.pallas import tpu as pltpu


# --------------------------------------------------------------- utilities ---
def _round_up(x, m):
    return ((x + m - 1) // m) * m


def _min_sublane(dtype):
    # Minimum second-to-last block dim per dtype packing (f32:8, bf16:16, i8:32).
    return {4: 8, 2: 16, 1: 32}.get(jnp.dtype(dtype).itemsize, 8)


def _floordiv_const(x, d):
    """x // d for a non-negative int32 array and positive trace-time int d.

    Built only from shift / f32 multiply / floor / compare so it lowers on all
    TPU generations (exact for quotients < 2**22, far beyond practical Lq)."""
    d = int(d)
    if d == 1:
        return x
    if d & (d - 1) == 0:                      # power of two -> single shift
        return x >> (d.bit_length() - 1)
    inv = np.float32(1.0 / d)
    q = jnp.floor(x.astype(jnp.float32) * inv).astype(jnp.int32)
    r = x - q * d                             # +/-1 fixup for rounding
    q = q + (r >= d).astype(jnp.int32) - (r < 0).astype(jnp.int32)
    return q


# ------------------------------------------------------------------ kernel ---
def _relpos_kernel(table_ref, o_ref, *, length_k, max_rel, T, P, chunk):
    """One grid step: write `rows_blk` packed output rows.

    table_ref: (P*T, P*num_units)  block-diagonal embedding table (VMEM resident)
    o_ref    : (rows_blk, P*num_units)  lane-dense packed output block
    Packed row R holds flat rows R*P .. R*P+P-1 of the (Lq*Lk, num_units) view.
    """
    rows_blk = o_ref.shape[0]
    width = P * T
    n_chunks = rows_blk // chunk
    base = pl.program_id(0) * rows_blk
    table = table_ref[...]

    # Column-only index math: loop-invariant, hoisted out of the chunk loop.
    local = lax.broadcasted_iota(jnp.int32, (chunk, width), 0)   # row in chunk
    col = lax.broadcasted_iota(jnp.int32, (chunk, width), 1)     # packed column
    p = _floordiv_const(col, T)          # which packed sub-row this column feeds
    t = col - p * T                      # table slot this column selects

    def emit(r0):
        flat = (base + r0 + local) * P + p            # flat row in (Lq*Lk, U)
        q = _floordiv_const(flat, length_k)           # query index i
        k = flat - q * length_k                       # key index j
        dist = jnp.minimum(jnp.maximum(k - q, q - k), max_rel)   # clip(|j-i|)
        onehot = (t == dist).astype(table.dtype)      # (chunk, P*T)
        o_ref[pl.ds(r0, chunk), :] = jnp.dot(
            onehot, table, preferred_element_type=jnp.float32
        ).astype(o_ref.dtype)

    if n_chunks == 1:
        emit(0)
    else:
        def body(c, carry):
            emit(pl.multiple_of(c * chunk, chunk))
            return carry
        lax.fori_loop(0, n_chunks, body, 0)


# ------------------------------------------------------------- block sizing --
def _choose_rows_block(total_packed, packed_width, itemsize, min_sublane,
                       target_out_bytes):
    row_bytes = packed_width * itemsize
    rows = max(min_sublane, target_out_bytes // row_bytes)
    rows = max(min_sublane, (rows // min_sublane) * min_sublane)
    if rows >= total_packed:
        rows = _round_up(total_packed, min_sublane)
        # Mid/large single-step problems: split so >=2 grid steps exist
        # (v7x megacore sharding + pipelining).
        if total_packed >= 2048:
            rows = _round_up(-(-total_packed // 2), min_sublane)
    return rows


def _pick_chunk(rows_blk, min_sublane, pref=512):
    """Largest divisor of rows_blk that is a multiple of min_sublane and <= pref."""
    if rows_blk <= pref:
        return rows_blk
    for c in range(pref, min_sublane - 1, -min_sublane):
        if rows_blk % c == 0:
            return c
    return rows_blk


# ----------------------------------------------------------------- wrapper ---
def relative_position_forward(embeddings_table, length_q, length_k,
                              max_relative_position, *,
                              target_block_bytes=4 << 20):
    """embeddings_table: (max_relative_position+1, num_units)
    -> (length_q, length_k, num_units)."""
    T, num_units = embeddings_table.shape
    assert T == max_relative_position + 1
    dtype = embeddings_table.dtype
    itemsize = jnp.dtype(dtype).itemsize
    min_sub = _min_sublane(dtype)

    total_flat = length_q * length_k

    # Lane-packing factor: pack P consecutive flat rows into one 128-lane-dense
    # output row (HBM row-major layout unchanged; only the 2-D view changes).
    if num_units < 128 and 128 % num_units == 0:
        P = 128 // num_units
    else:
        P = 1
    P = math.gcd(P, total_flat)
    packed_width = P * num_units
    total_packed = total_flat // P

    rows_blk = _choose_rows_block(total_packed, packed_width, itemsize, min_sub,
                                  target_block_bytes)
    chunk = _pick_chunk(rows_blk, min_sub)
    padded_packed = _round_up(total_packed, rows_blk)   # pad instead of a giant block
    n_steps = padded_packed // rows_blk

    # Trace-time block-diagonal table: (P*T, P*num_units); stays VMEM resident.
    blockdiag = jnp.kron(jnp.eye(P, dtype=dtype), embeddings_table)

    kernel = functools.partial(
        _relpos_kernel, length_k=length_k, max_rel=max_relative_position,
        T=T, P=P, chunk=chunk)

    out_block_bytes = rows_blk * packed_width * itemsize
    vmem_limit = int(min(64 << 20, max(32 << 20, 3 * out_block_bytes + (8 << 20))))

    cost = pl.CostEstimate(
        flops=2 * padded_packed * (P * T) * packed_width,
        transcendentals=0,
        bytes_accessed=padded_packed * packed_width * itemsize
                       + P * T * packed_width * itemsize)

    out = pl.pallas_call(
        kernel,
        out_shape=jax.ShapeDtypeStruct((padded_packed, packed_width), dtype),
        grid=(n_steps,),
        in_specs=[pl.BlockSpec((P * T, packed_width), lambda i: (0, 0))],
        out_specs=pl.BlockSpec((rows_blk, packed_width), lambda i: (i, 0)),
        compiler_params=pltpu.CompilerParams(
            dimension_semantics=("parallel",),
            vmem_limit_bytes=vmem_limit),
        cost_estimate=cost,
    )(blockdiag)

    out = out[:total_packed].reshape(length_q, length_k, num_units)
    return out


# --------------------------------------------------------------- reference ---
def reference_forward(embeddings_table, length_q, length_k, max_relative_position):
    rq = jnp.arange(length_q)
    rk = jnp.arange(length_k)
    idx = jnp.clip(jnp.abs(rk[None, :] - rq[:, None]), 0, max_relative_position)
    return embeddings_table[idx]


# ------------------------------------------------------------------- main ----
if __name__ == "__main__":
    key = jax.random.PRNGKey(0)

    def xavier_table(k, T, num_units):
        bound = math.sqrt(6.0 / (T + num_units))
        return jax.random.uniform(k, (T, num_units), jnp.float32,
                                  minval=-bound, maxval=bound)

    k1, k2, k3 = jax.random.split(key, 3)

    # Case 1: small shape implied by the module (single grid step, P=4 packing).
    num_units, max_rel, lq, lk = 32, 16, 8, 8
    tbl = xavier_table(k1, max_rel + 1, num_units)
    out = jax.block_until_ready(
        relative_position_forward(tbl, lq, lk, max_rel))
    ref = reference_forward(tbl, lq, lk, max_rel)
    np.testing.assert_allclose(np.asarray(out), np.asarray(ref),
                               rtol=1e-6, atol=1e-6)
    assert out.shape == (lq, lk, num_units)

    # Case 2: multi-step grid + in-kernel chunk loop (P=2 packing).
    num_units2, max_rel2, lq2, lk2 = 64, 24, 64, 64
    tbl2 = xavier_table(k2, max_rel2 + 1, num_units2)
    out2 = jax.block_until_ready(
        relative_position_forward(tbl2, lq2, lk2, max_rel2,
                                  target_block_bytes=512 * 1024))
    ref2 = reference_forward(tbl2, lq2, lk2, max_rel2)
    np.testing.assert_allclose(np.asarray(out2), np.asarray(ref2),
                               rtol=1e-6, atol=1e-6)

    # Case 3: ragged shape (row padding + P=1 fallback path).
    num_units3, max_rel3, lq3, lk3 = 48, 5, 7, 9
    tbl3 = xavier_table(k3, max_rel3 + 1, num_units3)
    out3 = jax.block_until_ready(
        relative_position_forward(tbl3, lq3, lk3, max_rel3))
    ref3 = reference_forward(tbl3, lq3, lk3, max_rel3)
    np.testing.assert_allclose(np.asarray(out3), np.asarray(ref3),
                               rtol=1e-6, atol=1e-6)

    print("KERNEL_OK")
</pallas_src>

<mosaic_0001>
module attributes {stable_mosaic.version = 11 : i64} {
  func.func @_relpos_kernel(%arg0: i32, %arg1: memref<68x128xf32, #tpu.memory_space<vmem>>, %arg2: memref<16x128xf32, #tpu.memory_space<vmem>>) attributes {dimension_semantics = [#tpu.dimension_semantics<parallel>], iteration_bounds = array<i64: 1>, scalar_prefetch = 0 : i64, scratch_operands = 0 : i64, tpu.core_type = #tpu.core_type<tc>, window_params = [{pipeline_mode = #tpu.pipeline_mode<synchronous>, transform_indices = @transform_0, window_bounds = array<i64: 68, 128>}, {transform_indices = @transform_1, window_bounds = array<i64: 16, 128>}]} {
    %c16_i32 = arith.constant 16 : i32
    %0 = arith.muli %arg0, %c16_i32 : i32
    %c0 = arith.constant 0 : index
    %c0_0 = arith.constant 0 : index
    %1 = vector.load %arg1[%c0, %c0_0] : memref<68x128xf32, #tpu.memory_space<vmem>>, vector<68x128xf32>
    %2 = tpu.iota {dimensions = array<i32: 0>} : vector<16x68xi32>
    %3 = tpu.iota {dimensions = array<i32: 1>} : vector<16x68xi32>
    %4 = arith.sitofp %3 : vector<16x68xi32> to vector<16x68xf32>
    %cst = arith.constant 0.0588235296 : f32
    %5 = vector.broadcast %cst : f32 to vector<16x68xf32>
    %6 = arith.mulf %4, %5 : vector<16x68xf32>
    %7 = math.floor %6 : vector<16x68xf32>
    %8 = arith.fptosi %7 : vector<16x68xf32> to vector<16x68xi32>
    %c17_i32 = arith.constant 17 : i32
    %9 = vector.broadcast %c17_i32 : i32 to vector<16x68xi32>
    %10 = arith.muli %8, %9 : vector<16x68xi32>
    %11 = arith.subi %3, %10 : vector<16x68xi32>
    %c17_i32_1 = arith.constant 17 : i32
    %12 = vector.broadcast %c17_i32_1 : i32 to vector<16x68xi32>
    %13 = arith.cmpi sge, %11, %12 : vector<16x68xi32>
    %14 = arith.extui %13 : vector<16x68xi1> to vector<16x68xi32>
    %15 = arith.addi %8, %14 : vector<16x68xi32>
    %c0_i32 = arith.constant 0 : i32
    %16 = vector.broadcast %c0_i32 : i32 to vector<16x68xi32>
    %17 = arith.cmpi slt, %11, %16 : vector<16x68xi32>
    %18 = arith.extui %17 : vector<16x68xi1> to vector<16x68xi32>
    %19 = arith.subi %15, %18 : vector<16x68xi32>
    %c17_i32_2 = arith.constant 17 : i32
    %20 = vector.broadcast %c17_i32_2 : i32 to vector<16x68xi32>
    %21 = arith.muli %19, %20 : vector<16x68xi32>
    %22 = arith.subi %3, %21 : vector<16x68xi32>
    %c0_i32_3 = arith.constant 0 : i32
    %23 = arith.addi %0, %c0_i32_3 : i32
    %24 = vector.broadcast %23 : i32 to vector<16x68xi32>
    %25 = arith.addi %24, %2 : vector<16x68xi32>
    %c4_i32 = arith.constant 4 : i32
    %26 = vector.broadcast %c4_i32 : i32 to vector<16x68xi32>
    %27 = arith.muli %25, %26 : vector<16x68xi32>
    %28 = arith.addi %27, %19 : vector<16x68xi32>
    %c3_i32 = arith.constant 3 : i32
    %29 = vector.broadcast %c3_i32 : i32 to vector<16x68xi32>
    %30 = arith.shrsi %28, %29 : vector<16x68xi32>
    %c8_i32 = arith.constant 8 : i32
    %31 = vector.broadcast %c8_i32 : i32 to vector<16x68xi32>
    %32 = arith.muli %30, %31 : vector<16x68xi32>
    %33 = arith.subi %28, %32 : vector<16x68xi32>
    %34 = arith.subi %33, %30 : vector<16x68xi32>
    %35 = arith.subi %30, %33 : vector<16x68xi32>
    %36 = arith.maxsi %34, %35 : vector<16x68xi32>
    %c16_i32_4 = arith.constant 16 : i32
    %37 = vector.broadcast %c16_i32_4 : i32 to vector<16x68xi32>
    %38 = arith.minsi %36, %37 : vector<16x68xi32>
    %39 = arith.cmpi eq, %22, %38 : vector<16x68xi32>
    %40 = arith.extui %39 : vector<16x68xi1> to vector<16x68xi32>
    %41 = arith.sitofp %40 : vector<16x68xi32> to vector<16x68xf32>
    %cst_5 = arith.constant dense<0.000000e+00> : vector<16x128xf32>
    %42 = tpu.matmul %41, %1, %cst_5 {dimension_numbers = #tpu.dot_dimension_numbers<[1], [0], [0], [1], [0, 0, 1, 1], [], []>} : vector<16x68xf32>, vector<68x128xf32>, vector<16x128xf32> -> vector<16x128xf32>
    %c0_6 = arith.constant 0 : index
    %c0_7 = arith.constant 0 : index
    %43 = vector.load %arg2[%c0_6, %c0_7] : memref<16x128xf32, #tpu.memory_space<vmem>>, vector<16x128xf32>
    tpu.vector_store %arg2[%c0_6, %c0_7], %42 {strides = array<i32>} : memref<16x128xf32, #tpu.memory_space<vmem>>, vector<16x128xf32>,
    return
  }
  func.func @transform_0(%arg0: i32) -> (i32, i32) {
    %c0_i32 = arith.constant 0 : i32
    %c0_i32_0 = arith.constant 0 : i32
    %c0_i32_1 = arith.constant 0 : i32
    return %c0_i32, %c0_i32_0 : i32, i32
  }
  func.func @transform_1(%arg0: i32) -> (i32, i32) {
    %c0_i32 = arith.constant 0 : i32
    %c0_i32_0 = arith.constant 0 : i32
    return %arg0, %c0_i32 : i32, i32
  }
}

</mosaic_0001>

<llo_original>
// kernel: tpu_custom_call.1
$region0: #{tpu_custom_call.1}
  #allocation0 [shape = 'u32[]', space=smem, size = 0x4, offset = 0x4, fixed_abs, tag = 'smem constant byte address 0x4 - core index']
  #allocation1 [shape = 'u32[144,128]{1,0:T(1,128)}', space=vmem, size = 0x12000, scoped, tag = 'internal scratch']
  %s0 = inlined_call_operand.hbm [shape: f32[68,128], index: 0, kind: input, shape index: {}]
  %s1 = inlined_call_operand.hbm [shape: f32[16,128], index: 1, kind: output, shape index: {}]
  %s2 = sld [smem:[#allocation0]]
  $region18: #{tpu_custom_call.1} parent=0
    _
  %s4 = ssub.s32 1, %s2
  %s5 = scalar_select 0, %s4, %s2
  $region1: #{tpu_custom_call.1} parent=0
    #allocation2 [shape = 'u8[36864]{0}', space=vmem, size = 0x9000, scoped, tag = 'input window, operand 0, single buffered']
    #allocation3 [shape = 's32[1]{0}', space=sflag, size = 0x4, scoped, tag = 'scoped memory for tpu_custom_call.1']
    #allocation4 [shape = 's32[1]{0}', space=sflag, size = 0x4, scoped, tag = 'scoped memory for tpu_custom_call.1']
    #allocation5 [shape = 'u8[8192]{0}', space=vmem, size = 0x2000, scoped, tag = 'output window, operand 0, single buffered']
    %6 = vsyncpa [#allocation3], 0
    %7 = vsyncpa [#allocation4], 0
    // Predicated region
    $region2: #{tpu_custom_call.1} parent=1 // pred_check
      _
    $region3: #{tpu_custom_call.1} parent=1 // pred_check_branch
      %9 = sbr.rel (0) target = $region5
    $region4: #{tpu_custom_call.1} parent=1 // pred_region
      %s11 = ssub.s32 1152, 1152
      %12 = vsyncadd [#allocation3], %s11
      %s13 = sshll.u32 [#allocation2], 4
      %s14 = int_to_ptr.vmem [resolvable:$true] %s13
      %19 = dma.hbm_to_vmem [thread:$0]  %s0, 1152, %s14, [#allocation3], 128, 128, 8
    $region5: #{tpu_custom_call.1} parent=1 // pred_fallthru
      _
    // Predicated region
    $region6: #{tpu_custom_call.1} parent=1 // pred_check
      _
    $region7: #{tpu_custom_call.1} parent=1 // pred_check_branch
      %21 = sbr.rel (0) target = $region9
    $region8: #{tpu_custom_call.1} parent=1 // pred_region
      %22 = dma.done [#allocation3], 1152
    $region9: #{tpu_custom_call.1} parent=1 // pred_fallthru
      _
    %s23 = smul.u32 0, 16
    %v24 = vld [vmem:[#allocation2] sm:$0xff]
    %v25 = vld [vmem:[#allocation2 + $0x8] sm:$0xff]
    %v26 = vld [vmem:[#allocation2 + $0x10] sm:$0xff]
    %v27 = vld [vmem:[#allocation2 + $0x18] sm:$0xff]
    %v28 = vld [vmem:[#allocation2 + $0x20] sm:$0xff]
    %v29 = vld [vmem:[#allocation2 + $0x28] sm:$0xff]
    %v30 = vld [vmem:[#allocation2 + $0x30] sm:$0xff]
    %v31 = vld [vmem:[#allocation2 + $0x38] sm:$0xff]
    %v32 = vld [vmem:[#allocation2 + $0x40] sm:$0xf]
    %v33 = vlaneseq
    %v34 = vshrl.u32 %v33, 7
    %v35 = vadd.s32 %v34, 8
    %v36 = vlaneseq
    %v37 = vand.u32 %v36, 127
    %v38 = vcvt.s32.f32 %v37
    %v39 = vmul.f32 %v38, 0.05882353
    %v40 = vfloor.f32 %v39
    %v41 = vcvt.f32.s32.to.zero.pseudo %v40
    %v42 = vmul.u32 %v41, 17
    %v43 = vsub.s32 %v37, %v42
    %vm44 = vcmp.ge.s32.totalorder %v43, 17
    %v45 = vsel %vm44, 1, 0
    %v46 = vadd.s32 %v41, %v45
    %vm47 = vcmp.lt.s32.totalorder %v43, 0
    %v48 = vsel %vm47, 1, 0
    %v49 = vsub.s32 %v46, %v48
    %v50 = vmul.u32 %v49, 17
    %v51 = vsub.s32 %v37, %v50
    %v52 = vstv %s23
    %v53 = vadd.s32 %v52, %v34
    %v54 = vadd.s32 %v52, %v35
    %v55 = vmul.u32 %v53, 4
    %v56 = vmul.u32 %v54, 4
    %v57 = vadd.s32 %v55, %v49
    %v58 = vadd.s32 %v56, %v49
    %v59 = vshra.s32 %v57, 3
    %v60 = vshra.s32 %v58, 3
    %v61 = vmul.u32 %v59, 8
    %v62 = vmul.u32 %v60, 8
    %v63 = vsub.s32 %v57, %v61
    %v64 = vsub.s32 %v58, %v62
    %v65 = vsub.s32 %v63, %v59
    %v66 = vsub.s32 %v64, %v60
    %v67 = vsub.s32 %v59, %v63
    %v68 = vsub.s32 %v60, %v64
    %vm69 = vcmp.gt.s32.totalorder %v65, %v67
    %v70 = vsel %vm69, %v65, %v67
    %vm71 = vcmp.gt.s32.totalorder %v66, %v68
    %v72 = vsel %vm71, %v66, %v68
    %vm73 = vcmp.lt.s32.totalorder %v70, 16
    %v74 = vsel %vm73, %v70, 16
    %vm75 = vcmp.lt.s32.totalorder %v72, 16
    %v76 = vsel %vm75, %v72, 16
    %vm77 = vcmp.eq.s32.totalorder %v51, %v74
    %vm78 = vcmp.eq.s32.totalorder %v51, %v76
    %v79 = vsel %vm77, 1, 0
    %v80 = vsel %vm78, 1, 0
    %v81 = vcvt.s32.f32 %v79
    %v82 = vcvt.s32.f32 %v80
    %vm83 = vcmask 556032
    %v85 = vsel %vm83, %v81, 0
    %v88 = vsel %vm83, %v82, 0
    %vm90 = vcmask 1043456
    %v92 = vsel %vm90, %v32, 0
    %94 = vmatprep.subr.mxu0 0.0
    %95 = vmatpush1.msra.mxu0 0.0
    %96 = vmatprep.subr.mxu0 0.0
    %97 = vmatpush1.msra.mxu0 0.0
    %98 = vmatprep.subr.mxu0 0.0
    %99 = vmatpush1.msra.mxu0 0.0
    %100 = vmatprep.subr.mxu0 0.0
    %101 = vmatpush1.msra.mxu0 0.0
    %102 = vmatprep.subr.mxu0 0.0
    %103 = vmatpush1.msra.mxu0 0.0
    %104 = vmatprep.subr.mxu0 0.0
    %105 = vmatpush1.msra.mxu0 0.0
    %106 = vmatprep.subr.mxu0 0.0
    %107 = vmatpush1.msra.mxu0 0.0
    %108 = vmatprep.subr.mxu0 0.0
    %109 = vmatpush1.msra.mxu0 %v92
    %110 = vmatprep.subr.mxu0 0.0
    %111 = vmatpush1.msra.mxu0 %v31
    %112 = vmatprep.subr.mxu0 0.0
    %113 = vmatpush1.msra.mxu0 %v30
    %114 = vmatprep.subr.mxu0 0.0
    %115 = vmatpush1.msra.mxu0 %v29
    %116 = vmatprep.subr.mxu0 0.0
    %117 = vmatpush1.msra.mxu0 %v28
    %118 = vmatprep.subr.mxu0 0.0
    %119 = vmatpush1.msra.mxu0 %v27
    %120 = vmatprep.subr.mxu0 0.0
    %121 = vmatpush1.msra.mxu0 %v26
    %122 = vmatprep.subr.mxu0 0.0
    %123 = vmatpush1.msra.mxu0 %v25
    %124 = vmatprep.subr.mxu0 0.0
    %125 = vmatpush1.msra.mxu0 %v24
    %126 = vmatprep.subr.mxu0 0.0
    %127 = vmatpush2.msra.mxu0 0.0
    %128 = vmatprep.subr.mxu0 0.0
    %129 = vmatpush2.msra.mxu0 0.0
    %130 = vmatprep.subr.mxu0 0.0
    %131 = vmatpush2.msra.mxu0 0.0
    %132 = vmatprep.subr.mxu0 0.0
    %133 = vmatpush2.msra.mxu0 0.0
    %134 = vmatprep.subr.mxu0 0.0
    %135 = vmatpush2.msra.mxu0 0.0
    %136 = vmatprep.subr.mxu0 0.0
    %137 = vmatpush2.msra.mxu0 0.0
    %138 = vmatprep.subr.mxu0 0.0
    %139 = vmatpush2.msra.mxu0 0.0
    %140 = vmatprep.subr.mxu0 0.0
    %141 = vmatpush2.msra.mxu0 0.0
    %142 = vmatprep.subr.mxu0 0.0
    %143 = vmatpush2.msra.mxu0 0.0
    %144 = vmatprep.subr.mxu0 0.0
    %145 = vmatpush2.msra.mxu0 0.0
    %146 = vmatprep.subr.mxu0 0.0
    %147 = vmatpush2.msra.mxu0 0.0
    %148 = vmatprep.subr.mxu0 0.0
    %149 = vmatpush2.msra.mxu0 0.0
    %150 = vmatprep.subr.mxu0 0.0
    %151 = vmatpush2.msra.mxu0 0.0
    %152 = vmatprep.subr.mxu0 0.0
    %153 = vmatpush2.msra.mxu0 0.0
    %154 = vmatprep.subr.mxu0 0.0
    %155 = vmatpush2.msra.mxu0 0.0
    %156 = vmatprep.subr.mxu0 0.0
    %157 = vmatpush2.msra.mxu0 0.0
    %158 = vmatprep.mubr.f32.mxu0 0.0
    %159 = vmatmul.mubr.f32.gmra.mxu0 %v85
    %v160 = vpop.f32.mrf.mxu0
    %v161 = vadd.f32 0.0, %v160
    %v162 = vpop.f32.mrf.mxu0
    %163 = vmatprep.mubr.f32.mxu0 0.0
    %164 = vmatmul.mubr.f32.gmra.mxu0 %v88
    %v165 = vpop.f32.mrf.mxu0
    %v166 = vadd.f32 0.0, %v165
    %v167 = vpop.f32.mrf.mxu0
    %168 = vdwg.mxu0
    %169 = vst [vmem:[#allocation5] sm:$0xff] %v161
    %170 = vst [vmem:[#allocation5 + $0x8] sm:$0xff] %v166
    // Predicated region
    $region10: #{tpu_custom_call.1} parent=1 // pred_check
      _
    $region11: #{tpu_custom_call.1} parent=1 // pred_check_branch
      %172 = sbr.rel (0) target = $region13
    $region12: #{tpu_custom_call.1} parent=1 // pred_region
      %s174 = ssub.s32 256, 256
      %175 = vsyncadd [#allocation4], %s174
      %s176 = sshll.u32 [#allocation5], 4
      %s177 = int_to_ptr.vmem [resolvable:$true] %s176
      %182 = dma.vmem_to_hbm [thread:$0]  %s177, 256, %s1, [#allocation4], 128, 128, 8
    $region13: #{tpu_custom_call.1} parent=1 // pred_fallthru
      _
    // Predicated region
    $region14: #{tpu_custom_call.1} parent=1 // pred_check
      _
    $region15: #{tpu_custom_call.1} parent=1 // pred_check_branch
      %184 = sbr.rel (0) target = $region17
    $region16: #{tpu_custom_call.1} parent=1 // pred_region
      %185 = dma.done [#allocation4], 256
    $region17: #{tpu_custom_call.1} parent=1 // pred_fallthru
      _
    %186 = vsyncpa [#allocation3], 1
    %187 = vsyncpa [#allocation4], 1

</llo_original>
